<compile_context>
chip_gen: v7x
topology: tpu7x:2x2x1
jax: 0.10.0
libtpu: 0.0.40
codegen_flags: <defaults>
</compile_context>

<pallas_src>
import jax
import jax.numpy as jnp
from jax import lax
from jax.experimental import pallas as pl
from jax.experimental.pallas import tpu as pltpu

MAX_PAD = 18          # pad once by the largest dilation
DILATIONS = (6, 12, 18)
N_TAPS = len(DILATIONS) * 9   # 27


def aspp_matmul_kernel(a_ref, w_ref, b_ref, o_ref):
    """One (batch, spatial-tile) grid step.

    a_ref : (1, K, TM)  VMEM   im2col slab tile (K = 27*C, TM spatial pixels)
    w_ref : (O, K)      VMEM   concatenated conv weights (all 3 dilations)
    b_ref : (O, 1)      VMEM   summed biases
    o_ref : (1, O, TM)  VMEM   lane-dense output tile
    """
    acc = jnp.dot(w_ref[...], a_ref[0],
                  preferred_element_type=jnp.float32)       # (O, TM) on the MXU
    o_ref[0] = (acc + b_ref[...]).astype(o_ref.dtype)


def _im2col_slab(x):
    """(N, C, H, W) -> (N, 27*C, H*W) slab of the 27 dilated-tap windows."""
    N, C, H, W = x.shape
    xp = jnp.pad(x, ((0, 0), (0, 0), (MAX_PAD, MAX_PAD), (MAX_PAD, MAX_PAD)))
    taps = []
    for d in DILATIONS:
        for kh in range(3):
            for kw in range(3):
                h0 = MAX_PAD - d + kh * d
                w0 = MAX_PAD - d + kw * d
                taps.append(xp[:, :, h0:h0 + H, w0:w0 + W])
    # (N, 27, C, H, W) -> (N, 27*C, H*W);  k = ((d*3 + kh)*3 + kw)*C + c
    return jnp.stack(taps, axis=1).reshape(N, N_TAPS * C, H * W)


def aspp_forward(x, w6, b6, w12, b12, w18, b18):
    """x: (N, C, H, W) f32.  w*: (O, C, 3, 3).  b*: (O,).  Returns (N, O, H, W)."""
    N, C, H, W = x.shape
    O = w6.shape[0]
    M = H * W
    K = N_TAPS * C

    # Wrapper-side glue: im2col gather (pure data movement) + weight packing.
    a = _im2col_slab(x.astype(jnp.float32))                       # (N, K, M)
    ws = jnp.stack([w6, w12, w18], axis=0).astype(jnp.float32)    # (3, O, C, 3, 3)
    wt = ws.transpose(1, 0, 3, 4, 2).reshape(O, K)                # (O, K) matches slab k-order
    bsum = (b6 + b12 + b18).astype(jnp.float32).reshape(O, 1)     # (O, 1)

    # Lane-dense spatial tile (multiple of 128 when possible).
    TM = 128 if M % 128 == 0 else M
    grid = (N, M // TM)

    out = pl.pallas_call(
        aspp_matmul_kernel,
        out_shape=jax.ShapeDtypeStruct((N, O, M), x.dtype),
        grid=grid,
        in_specs=[
            pl.BlockSpec((1, K, TM), lambda n, m: (n, 0, m)),   # slab tile
            pl.BlockSpec((O, K), lambda n, m: (0, 0)),          # weights (VMEM)
            pl.BlockSpec((O, 1), lambda n, m: (0, 0)),          # bias    (VMEM)
        ],
        out_specs=pl.BlockSpec((1, O, TM), lambda n, m: (n, 0, m)),
        compiler_params=pltpu.CompilerParams(
            dimension_semantics=("parallel", "parallel")),
    )(a, wt, bsum)

    return out.reshape(N, O, H, W)


def _reference(x, w6, b6, w12, b12, w18, b18):
    """Pure-JAX reference using lax.conv_general_dilated (matches nn.Conv2d)."""
    def dconv(w, b, d):
        y = lax.conv_general_dilated(
            x, w, window_strides=(1, 1), padding=[(d, d), (d, d)],
            rhs_dilation=(d, d),
            dimension_numbers=("NCHW", "OIHW", "NCHW"))
        return y + b[None, :, None, None]
    return dconv(w6, b6, 6) + dconv(w12, b12, 12) + dconv(w18, b18, 18)


if __name__ == "__main__":
    # Small deterministic setup: batch=2, in_channel=4, depth=4, spatial 16x16.
    N, C, O, H, W = 2, 4, 4, 16, 16
    key = jax.random.PRNGKey(0)
    kx, k6w, k6b, k12w, k12b, k18w, k18b = jax.random.split(key, 7)

    x = jax.random.normal(kx, (N, C, H, W), dtype=jnp.float32)
    w6 = 0.1 * jax.random.normal(k6w, (O, C, 3, 3), dtype=jnp.float32)
    b6 = 0.1 * jax.random.normal(k6b, (O,), dtype=jnp.float32)
    w12 = 0.1 * jax.random.normal(k12w, (O, C, 3, 3), dtype=jnp.float32)
    b12 = 0.1 * jax.random.normal(k12b, (O,), dtype=jnp.float32)
    w18 = 0.1 * jax.random.normal(k18w, (O, C, 3, 3), dtype=jnp.float32)
    b18 = 0.1 * jax.random.normal(k18b, (O,), dtype=jnp.float32)

    out = aspp_forward(x, w6, b6, w12, b12, w18, b18)
    out = jax.block_until_ready(out)

    ref = jax.block_until_ready(_reference(x, w6, b6, w12, b12, w18, b18))
    assert out.shape == (N, O, H, W), out.shape
    assert jnp.allclose(out, ref, rtol=1e-4, atol=1e-4), float(
        jnp.max(jnp.abs(out - ref)))

    print("KERNEL_OK")
</pallas_src>

<mosaic_0001>
module attributes {stable_mosaic.version = 11 : i64} {
  func.func @aspp_matmul_kernel(%arg0: i32, %arg1: i32, %arg2: memref<1x108x128xf32, #tpu.memory_space<vmem>>, %arg3: memref<4x108xf32, #tpu.memory_space<vmem>>, %arg4: memref<4x1xf32, #tpu.memory_space<vmem>>, %arg5: memref<1x4x128xf32, #tpu.memory_space<vmem>>) attributes {dimension_semantics = [#tpu.dimension_semantics<parallel>, #tpu.dimension_semantics<parallel>], iteration_bounds = array<i64: 2, 2>, scalar_prefetch = 0 : i64, scratch_operands = 0 : i64, tpu.core_type = #tpu.core_type<tc>, window_params = [{transform_indices = @transform_0, window_bounds = array<i64: 1, 108, 128>}, {pipeline_mode = #tpu.pipeline_mode<synchronous>, transform_indices = @transform_1, window_bounds = array<i64: 4, 108>}, {pipeline_mode = #tpu.pipeline_mode<synchronous>, transform_indices = @transform_2, window_bounds = array<i64: 4, 1>}, {transform_indices = @transform_3, window_bounds = array<i64: 1, 4, 128>}]} {
    %c0 = arith.constant 0 : index
    %c0_0 = arith.constant 0 : index
    %0 = vector.load %arg3[%c0, %c0_0] : memref<4x108xf32, #tpu.memory_space<vmem>>, vector<4x108xf32>
    %c0_1 = arith.constant 0 : index
    %c0_2 = arith.constant 0 : index
    %c0_3 = arith.constant 0 : index
    %1 = vector.load %arg2[%c0_1, %c0_2, %c0_3] : memref<1x108x128xf32, #tpu.memory_space<vmem>>, vector<1x108x128xf32>
    %2 = vector.shape_cast %1 : vector<1x108x128xf32> to vector<108x128xf32>
    %cst = arith.constant dense<0.000000e+00> : vector<4x128xf32>
    %3 = tpu.matmul %0, %2, %cst {dimension_numbers = #tpu.dot_dimension_numbers<[1], [0], [0], [1], [0, 0, 1, 1], [], []>} : vector<4x108xf32>, vector<108x128xf32>, vector<4x128xf32> -> vector<4x128xf32>
    %c0_4 = arith.constant 0 : index
    %c0_5 = arith.constant 0 : index
    %4 = vector.load %arg4[%c0_4, %c0_5] : memref<4x1xf32, #tpu.memory_space<vmem>>, vector<4x1xf32>
    %5 = vector.broadcast %4 : vector<4x1xf32> to vector<4x128xf32>
    %6 = arith.addf %3, %5 : vector<4x128xf32>
    %c0_6 = arith.constant 0 : index
    %c0_7 = arith.constant 0 : index
    %c0_8 = arith.constant 0 : index
    %7 = vector.load %arg5[%c0_6, %c0_7, %c0_8] : memref<1x4x128xf32, #tpu.memory_space<vmem>>, vector<1x4x128xf32>
    %8 = vector.shape_cast %7 : vector<1x4x128xf32> to vector<4x128xf32>
    %9 = vector.shape_cast %6 : vector<4x128xf32> to vector<1x4x128xf32>
    tpu.vector_store %arg5[%c0_6, %c0_7, %c0_8], %9 {strides = array<i32>} : memref<1x4x128xf32, #tpu.memory_space<vmem>>, vector<1x4x128xf32>,
    return
  }
  func.func @transform_0(%arg0: i32, %arg1: i32) -> (i32, i32, i32) {
    %c0_i32 = arith.constant 0 : i32
    %c0_i32_0 = arith.constant 0 : i32
    return %arg0, %c0_i32, %arg1 : i32, i32, i32
  }
  func.func @transform_1(%arg0: i32, %arg1: i32) -> (i32, i32) {
    %c0_i32 = arith.constant 0 : i32
    %c0_i32_0 = arith.constant 0 : i32
    %c0_i32_1 = arith.constant 0 : i32
    return %c0_i32, %c0_i32_0 : i32, i32
  }
  func.func @transform_2(%arg0: i32, %arg1: i32) -> (i32, i32) {
    %c0_i32 = arith.constant 0 : i32
    %c0_i32_0 = arith.constant 0 : i32
    %c0_i32_1 = arith.constant 0 : i32
    return %c0_i32, %c0_i32_0 : i32, i32
  }
  func.func @transform_3(%arg0: i32, %arg1: i32) -> (i32, i32, i32) {
    %c0_i32 = arith.constant 0 : i32
    %c0_i32_0 = arith.constant 0 : i32
    return %arg0, %c0_i32, %arg1 : i32, i32, i32
  }
}

</mosaic_0001>

<llo_original>
// kernel: tpu_custom_call.1
$region0: #{tpu_custom_call.1}
  #allocation0 [shape = 'u32[]', space=smem, size = 0x4, offset = 0x4, fixed_abs, tag = 'smem constant byte address 0x4 - core index']
  #allocation1 [shape = 'u32[144,128]{1,0:T(1,128)}', space=vmem, size = 0x12000, scoped, tag = 'internal scratch']
  %s0 = inlined_call_operand.vmem [shape: f32[2,108,256], index: 0, kind: input, shape index: {}]
  %s1 = inlined_call_operand.vmem [shape: f32[4,108], index: 1, kind: input, shape index: {}]
  %s2 = inlined_call_operand.vmem [shape: f32[4,1], index: 2, kind: input, shape index: {}]
  %s3 = inlined_call_operand.hbm [shape: f32[2,4,256], index: 3, kind: output, shape index: {}]
  %s4 = sld [smem:[#allocation0]]
  $region83: #{tpu_custom_call.1} parent=0
    _
  %s6 = ssub.s32 1, %s4
  %s7 = scalar_select 0, %s6, %s4
  $region1: #{tpu_custom_call.1} parent=0
    #allocation2 [shape = 'u8[114688]{0}', space=vmem, size = 0x1c000, scoped, tag = 'input window, operand 0']
    #allocation3 [shape = 'u8[4096]{0}', space=vmem, size = 0x1000, scoped, tag = 'output window, operand 0']
    #allocation4 [shape = 's32[2]{0}', space=sflag, size = 0x8, scoped, tag = 'scoped memory for tpu_custom_call.1']
    %8 = vsyncpa [#allocation4], 0
    %s9 = scalar_lea.sflag [#allocation4], 1
    %10 = vsyncpa %s9, 0
    loop: start=0, step=1, limit=6
    $region2: #{tpu_custom_call.1} parent=1 // loop_pre_header
      _
    $region3: #{tpu_custom_call.1} parent=1 // loop_header
      %s12 = sphi 0, %s16
      %p13 = scmp.ge.s32.totalorder %s12, 6
      %s19 = sphi 0, %s31
      %s20 = sphi 0, %s27
      %s21 = sphi 0, %s19
      %s22 = sphi 0, %s20
      %s23 = sphi 0, %s21
      %s24 = sphi 0, %s22
      %s36 = sphi 0, %s38
      %s39 = sphi 0, %s36
      %s40 = sphi 0, %s39
      %s56 = sphi 0, %s40
      %s60 = sphi 0, %s60
      %s62 = sphi 0, %s60
      %s63 = sphi 0, %s62
      %s77 = sphi 0, %s63
      %s81 = sphi 0, %s81
      %s83 = sphi 0, %s81
      %s84 = sphi 0, %s83
      %s98 = sphi 0, %s84
      %s106 = sphi 0, %s108
      %s109 = sphi 0, %s106
      %s110 = sphi 0, %s109
      %s126 = sphi 0, %s110
    $region4: #{tpu_custom_call.1} parent=1 // loop_header_branch
      %15 = sbr.rel (%p13) target = $region8
    $region5: #{tpu_custom_call.1} parent=1 // loop_body
      %s17 = ssub.s32 %s12, 1
      %s18 = ssub.s32 %s12, 2
      %s25 = sadd.s32 1, %s20
      %p26 = scmp.ge.s32.totalorder %s25, 2
      %s27 = scalar_select %p26, 0, %s25
      %s28 = sadd.s32 1, %s19
      %s29 = scalar_select %p26, %s28, %s19
      %p30 = scmp.ge.s32.totalorder %s29, 2
      %s31 = scalar_select %p30, 0, %s29
      %s32 = ssub.s32 %s19, %s31
      %s33 = ssub.s32 %s20, %s27
      %s34 = sor.u32 %s32, %s33
      %p35 = scmp.eq.s32.totalorder %s34, 0
      %s37 = sadd.s32 %s36, 1
      %s38 = scalar_select %p35, %s36, %s37
      %p41 = pneg %p35
      %p42 = scmp.eq.s32.totalorder %s12, 3
      %p43 = por %p41, %p42
      %p44 = scmp.ne.s32.totalorder %s36, %s39
      %p45 = scmp.eq.s32.totalorder %s12, 0
      %p46 = por %p44, %p45
      %p47 = scmp.ne.s32.totalorder %s36, %s39
      %p48 = scmp.eq.s32.totalorder %s17, 3
      %p49 = por %p47, %p48
      %p50 = scmp.ne.s32.totalorder %s39, %s40
      %p51 = scmp.eq.s32.totalorder %s17, 0
      %p52 = por %p50, %p51
      %p53 = scmp.ne.s32.totalorder %s39, %s40
      %p54 = scmp.eq.s32.totalorder %s18, 3
      %p55 = por %p53, %p54
      %p57 = scmp.ne.s32.totalorder %s40, %s56
      %p58 = scmp.eq.s32.totalorder %s18, 0
      %p59 = por %p57, %p58
      %s61 = sadd.s32 %s60, 1
      %p64 = scmp.eq.s32.totalorder %s12, 3
      %p65 = scmp.ne.s32.totalorder %s60, %s62
      %p66 = scmp.eq.s32.totalorder %s12, 0
      %p67 = por %p65, %p66
      %p68 = scmp.ne.s32.totalorder %s60, %s62
      %p69 = scmp.eq.s32.totalorder %s17, 3
      %p70 = por %p68, %p69
      %p71 = scmp.ne.s32.totalorder %s62, %s63
      %p72 = scmp.eq.s32.totalorder %s17, 0
      %p73 = por %p71, %p72
      %p74 = scmp.ne.s32.totalorder %s62, %s63
      %p75 = scmp.eq.s32.totalorder %s18, 3
      %p76 = por %p74, %p75
      %p78 = scmp.ne.s32.totalorder %s63, %s77
      %p79 = scmp.eq.s32.totalorder %s18, 0
      %p80 = por %p78, %p79
      %s82 = sadd.s32 %s81, 1
      %p85 = scmp.eq.s32.totalorder %s12, 3
      %p86 = scmp.ne.s32.totalorder %s81, %s83
      %p87 = scmp.eq.s32.totalorder %s12, 0
      %p88 = por %p86, %p87
      %p89 = scmp.ne.s32.totalorder %s81, %s83
      %p90 = scmp.eq.s32.totalorder %s17, 3
      %p91 = por %p89, %p90
      %p92 = scmp.ne.s32.totalorder %s83, %s84
      %p93 = scmp.eq.s32.totalorder %s17, 0
      %p94 = por %p92, %p93
      %p95 = scmp.ne.s32.totalorder %s83, %s84
      %p96 = scmp.eq.s32.totalorder %s18, 3
      %p97 = por %p95, %p96
      %p99 = scmp.ne.s32.totalorder %s84, %s98
      %p100 = scmp.eq.s32.totalorder %s18, 0
      %p101 = por %p99, %p100
      %s102 = ssub.s32 %s19, %s31
      %s103 = ssub.s32 %s20, %s27
      %s104 = sor.u32 %s102, %s103
      %p105 = scmp.eq.s32.totalorder %s104, 0
      %s107 = sadd.s32 %s106, 1
      %s108 = scalar_select %p105, %s106, %s107
      %p111 = pneg %p105
      %p112 = scmp.eq.s32.totalorder %s12, 3
      %p113 = por %p111, %p112
      %p114 = scmp.ne.s32.totalorder %s106, %s109
      %p115 = scmp.eq.s32.totalorder %s12, 0
      %p116 = por %p114, %p115
      %p117 = scmp.ne.s32.totalorder %s106, %s109
      %p118 = scmp.eq.s32.totalorder %s17, 3
      %p119 = por %p117, %p118
      %p120 = scmp.ne.s32.totalorder %s109, %s110
      %p121 = scmp.eq.s32.totalorder %s17, 0
      %p122 = por %p120, %p121
      %p123 = scmp.ne.s32.totalorder %s109, %s110
      %p124 = scmp.eq.s32.totalorder %s18, 3
      %p125 = por %p123, %p124
      %p127 = scmp.ne.s32.totalorder %s110, %s126
      %p128 = scmp.eq.s32.totalorder %s18, 0
      %p129 = por %p127, %p128
      %p130 = scmp.le.s32.totalorder 1, %s12
      %p131 = scmp.lt.s32.totalorder %s12, 5
      %p132 = pnand %p130, %p131
      %p133 = pneg %p132
      // Predicated region
      $region9: #{tpu_custom_call.1} parent=5 // pred_check
        _
      $region10: #{tpu_custom_call.1} parent=5 // pred_check_branch
        %135 = sbr.rel (%p132) target = $region12
      $region11: #{tpu_custom_call.1} parent=5 // pred_region
        %s136 = ssub.s32 %s12, 1
        // Predicated region
        $region13: #{tpu_custom_call.1} parent=11 // pred_check
          %p137 = pneg %p73
        $region14: #{tpu_custom_call.1} parent=11 // pred_check_branch
          %139 = sbr.rel (%p137) target = $region16
        $region15: #{tpu_custom_call.1} parent=11 // pred_region
          _
        $region16: #{tpu_custom_call.1} parent=11 // pred_fallthru
          _
        // Predicated region
        $region17: #{tpu_custom_call.1} parent=11 // pred_check
          %p140 = pneg %p94
        $region18: #{tpu_custom_call.1} parent=11 // pred_check_branch
          %142 = sbr.rel (%p140) target = $region20
        $region19: #{tpu_custom_call.1} parent=11 // pred_region
          _
        $region20: #{tpu_custom_call.1} parent=11 // pred_fallthru
          _
      $region12: #{tpu_custom_call.1} parent=5 // pred_fallthru
        _
      %p143 = scmp.lt.s32.totalorder %s12, 4
      // Predicated region
      $region21: #{tpu_custom_call.1} parent=5 // pred_check
        %p144 = pneg %p143
      $region22: #{tpu_custom_call.1} parent=5 // pred_check_branch
        %146 = sbr.rel (%p144) target = $region24
      $region23: #{tpu_custom_call.1} parent=5 // pred_region
        // Predicated region
        $region25: #{tpu_custom_call.1} parent=23 // pred_check
          %p147 = pneg %p46
        $region26: #{tpu_custom_call.1} parent=23 // pred_check_branch
          %149 = sbr.rel (%p147) target = $region28
        $region27: #{tpu_custom_call.1} parent=23 // pred_region
          %s150 = sand.u32 %s36, 1
          %s151 = sand.u32 %s36, 1
          %s152 = smul.addr %s151, 112
          %s153 = scalar_lea.vmem [#allocation2], %s152
          %s154 = smul.addr %s19, 28
          %s155 = sadd.s32 %s20, %s154
          %s156 = smul.addr %s155, 8
          %s157 = scalar_lea.vmem %s0, %s156
          // Predicated region
          $region29: #{tpu_custom_call.1} parent=27 // pred_check
            _
          $region30: #{tpu_custom_call.1} parent=27 // pred_check_branch
            %159 = sbr.rel (0) target = $region32
          $region31: #{tpu_custom_call.1} parent=27 // pred_region
            // Predicated region
            $region33: #{tpu_custom_call.1} parent=31 // pred_check
              _
            $region34: #{tpu_custom_call.1} parent=31 // pred_check_branch
              %161 = sbr.rel (0) target = $region36
            $region35: #{tpu_custom_call.1} parent=31 // pred_region
              // Predicated region
              $region48: #{tpu_custom_call.1} parent=35 // pred_check
                _
              $region49: #{tpu_custom_call.1} parent=35 // pred_check_branch
                %202 = sbr.rel (0) target = $region51
              $region50: #{tpu_custom_call.1} parent=35 // pred_region
                loop: start=0, step=1, limit=1
                $region52: #{tpu_custom_call.1} parent=50 // loop_pre_header
                  _
                $region53: #{tpu_custom_call.1} parent=50 // loop_header
                  %s204 = sphi 0, %s208
                  %p205 = scmp.ge.s32.totalorder %s204, 1
                  %s209 = sphi %s157, %s157
                  %s210 = sphi %s153, %s153
                $region54: #{tpu_custom_call.1} parent=50 // loop_header_branch
                  %207 = sbr.rel (%p205) target = $region58
                $region55: #{tpu_custom_call.1} parent=50 // loop_body
                  %v211 = vld [vmem:[%s209] sm:$0xff]
                  %212 = vst [vmem:[%s210] sm:$0xff] %v211
                  %v213 = vld [vmem:[%s209 + $0x10] sm:$0xff]
                  %214 = vst [vmem:[%s210 + $0x8] sm:$0xff] %v213
                  %v215 = vld [vmem:[%s209 + $0x20] sm:$0xff]
                  %216 = vst [vmem:[%s210 + $0x10] sm:$0xff] %v215
                  %v217 = vld [vmem:[%s209 + $0x30] sm:$0xff]
                  %218 = vst [vmem:[%s210 + $0x18] sm:$0xff] %v217
                  %v219 = vld [vmem:[%s209 + $0x40] sm:$0xff]
                  %220 = vst [vmem:[%s210 + $0x20] sm:$0xff] %v219
                  %v221 = vld [vmem:[%s209 + $0x50] sm:$0xff]
                  %222 = vst [vmem:[%s210 + $0x28] sm:$0xff] %v221
                  %v223 = vld [vmem:[%s209 + $0x60] sm:$0xff]
                  %224 = vst [vmem:[%s210 + $0x30] sm:$0xff] %v223
                  %v225 = vld [vmem:[%s209 + $0x70] sm:$0xff]
                  %226 = vst [vmem:[%s210 + $0x38] sm:$0xff] %v225
                  %v227 = vld [vmem:[%s209 + $0x80] sm:$0xff]
                  %228 = vst [vmem:[%s210 + $0x40] sm:$0xff] %v227
                  %v229 = vld [vmem:[%s209 + $0x90] sm:$0xff]
                  %230 = vst [vmem:[%s210 + $0x48] sm:$0xff] %v229
                  %v231 = vld [vmem:[%s209 + $0xa0] sm:$0xff]
                  %232 = vst [vmem:[%s210 + $0x50] sm:$0xff] %v231
                  %v233 = vld [vmem:[%s209 + $0xb0] sm:$0xff]
                  %234 = vst [vmem:[%s210 + $0x58] sm:$0xff] %v233
                  %v235 = vld [vmem:[%s209 + $0xc0] sm:$0xff]
                  %236 = vst [vmem:[%s210 + $0x60] sm:$0xff] %v235
                  %v237 = vld [vmem:[%s209 + $0xd0] sm:$0xff]
                  %238 = vst [vmem:[%s210 + $0x68] sm:$0xff] %v237
                $region56: #{tpu_custom_call.1} parent=50 // loop_footer
                  %s208 = sadd.s32 1, %s204
                $region57: #{tpu_custom_call.1} parent=50 // loop_footer_branch
                  %203 = sbr.rel target = $region53
                $region58: #{tpu_custom_call.1} parent=50 // loop_exit
                  _
              $region51: #{tpu_custom_call.1} parent=35 // pred_fallthru
                _
              // Predicated region
              $region59: #{tpu_custom_call.1} parent=35 // pred_check
                _
              $region60: #{tpu_custom_call.1} parent=35 // pred_check_branch
                %240 = sbr.rel target = $region62
              $region61: #{tpu_custom_call.1} parent=35 // pred_region
                _
              $region62: #{tpu_custom_call.1} parent=35 // pred_fallthru
                _
            $region36: #{tpu_custom_call.1} parent=31 // pred_fallthru
              _
            // Predicated region
            $region37: #{tpu_custom_call.1} parent=31 // pred_check
              _
            $region38: #{tpu_custom_call.1} parent=31 // pred_check_branch
              %163 = sbr.rel target = $region40
            $region39: #{tpu_custom_call.1} parent=31 // pred_region
              loop: start=0, step=1, limit=1
              $region41: #{tpu_custom_call.1} parent=39 // loop_pre_header
                _
              $region42: #{tpu_custom_call.1} parent=39 // loop_header
                %s166 = sphi 0, %s170
                %p167 = scmp.ge.s32.totalorder %s166, 1
                %s171 = sphi %s157, %s157
                %s172 = sphi %s153, %s153
              $region43: #{tpu_custom_call.1} parent=39 // loop_header_branch
                %169 = sbr.rel (%p167) target = $region47
              $region44: #{tpu_custom_call.1} parent=39 // loop_body
                %v173 = vld [vmem:[%s171] sm:$0xff]
                %174 = vst [vmem:[%s172] sm:$0xff] %v173
                %v175 = vld [vmem:[%s171 + $0x10] sm:$0xff]
                %176 = vst [vmem:[%s172 + $0x8] sm:$0xff] %v175
                %v177 = vld [vmem:[%s171 + $0x20] sm:$0xff]
                %178 = vst [vmem:[%s172 + $0x10] sm:$0xff] %v177
                %v179 = vld [vmem:[%s171 + $0x30] sm:$0xff]
                %180 = vst [vmem:[%s172 + $0x18] sm:$0xff] %v179
                %v181 = vld [vmem:[%s171 + $0x40] sm:$0xff]
                %182 = vst [vmem:[%s172 + $0x20] sm:$0xff] %v181
                %v183 = vld [vmem:[%s171 + $0x50] sm:$0xff]
                %184 = vst [vmem:[%s172 + $0x28] sm:$0xff] %v183
                %v185 = vld [vmem:[%s171 + $0x60] sm:$0xff]
                %186 = vst [vmem:[%s172 + $0x30] sm:$0xff] %v185
                %v187 = vld [vmem:[%s171 + $0x70] sm:$0xff]
                %188 = vst [vmem:[%s172 + $0x38] sm:$0xff] %v187
                %v189 = vld [vmem:[%s171 + $0x80] sm:$0xff]
                %190 = vst [vmem:[%s172 + $0x40] sm:$0xff] %v189
                %v191 = vld [vmem:[%s171 + $0x90] sm:$0xff]
                %192 = vst [vmem:[%s172 + $0x48] sm:$0xff] %v191
                %v193 = vld [vmem:[%s171 + $0xa0] sm:$0xff]
                %194 = vst [vmem:[%s172 + $0x50] sm:$0xff] %v193
                %v195 = vld [vmem:[%s171 + $0xb0] sm:$0xff]
                %196 = vst [vmem:[%s172 + $0x58] sm:$0xff] %v195
                %v197 = vld [vmem:[%s171 + $0xc0] sm:$0xff]
                %198 = vst [vmem:[%s172 + $0x60] sm:$0xff] %v197
                %v199 = vld [vmem:[%s171 + $0xd0] sm:$0xff]
                %200 = vst [vmem:[%s172 + $0x68] sm:$0xff] %v199
              $region45: #{tpu_custom_call.1} parent=39 // loop_footer
                %s170 = sadd.s32 1, %s166
              $region46: #{tpu_custom_call.1} parent=39 // loop_footer_branch
                %165 = sbr.rel target = $region42
              $region47: #{tpu_custom_call.1} parent=39 // loop_exit
                _
            $region40: #{tpu_custom_call.1} parent=31 // pred_fallthru
              _
          $region32: #{tpu_custom_call.1} parent=27 // pred_fallthru
            _
          %241 = vnop
        $region28: #{tpu_custom_call.1} parent=23 // pred_fallthru
          _
      $region24: #{tpu_custom_call.1} parent=5 // pred_fallthru
        _
      %p242 = scmp.le.s32.totalorder 1, %s12
      %p243 = scmp.lt.s32.totalorder %s12, 5
      %p244 = pnand %p242, %p243
      %p245 = pneg %p244
      // Predicated region
      $region63: #{tpu_custom_call.1} parent=5 // pred_check
        _
      $region64: #{tpu_custom_call.1} parent=5 // pred_check_branch
        %247 = sbr.rel (%p244) target = $region66
      $region65: #{tpu_custom_call.1} parent=5 // pred_region
        %s248 = ssub.s32 %s12, 1
        %s249 = sand.u32 %s39, 1
        %s250 = sand.u32 %s39, 1
        %s251 = smul.addr %s250, 112
        %s252 = scalar_lea.vmem [#allocation2], %s251
        // Predicated region
        $region67: #{tpu_custom_call.1} parent=65 // pred_check
          %p253 = pneg %p52
        $region68: #{tpu_custom_call.1} parent=65 // pred_check_branch
          %255 = sbr.rel (%p253) target = $region70
        $region69: #{tpu_custom_call.1} parent=65 // pred_region
          _
        $region70: #{tpu_custom_call.1} parent=65 // pred_fallthru
          _
        %s256 = sand.u32 %s39, 1
        %s257 = sand.u32 %s39, 1
        %s258 = smul.addr %s257, 112
        %s259 = scalar_lea.vmem [#allocation2], %s258
        %p260 = pneg %p52
        %p261 = pneg %p49
        %p262 = pneg %p73
        %p263 = pneg %p70
        %p264 = pneg %p94
        %p265 = pneg %p91
        %p266 = pneg %p122
        %p267 = pneg %p119
        %s268 = sand.u32 %s109, 1
        %s269 = scalar_lea.sflag [#allocation4], %s268
        %s270 = sand.u32 %s109, 1
        %s271 = smul.addr %s270, 4
        %s272 = scalar_lea.vmem [#allocation3], %s271
        %v273 = vld [vmem:[%s1] sm:$0xf]
        %v274 = vld [vmem:[%s252] sm:$0xff]
        %v275 = vld [vmem:[%s252 + $0x8] sm:$0xff]
        %v276 = vld [vmem:[%s252 + $0x10] sm:$0xff]
        %v277 = vld [vmem:[%s252 + $0x18] sm:$0xff]
        %v278 = vld [vmem:[%s252 + $0x20] sm:$0xff]
        %v279 = vld [vmem:[%s252 + $0x28] sm:$0xff]
        %v280 = vld [vmem:[%s252 + $0x30] sm:$0xff]
        %v281 = vld [vmem:[%s252 + $0x38] sm:$0xff]
        %v282 = vld [vmem:[%s252 + $0x40] sm:$0xff]
        %v283 = vld [vmem:[%s252 + $0x48] sm:$0xff]
        %v284 = vld [vmem:[%s252 + $0x50] sm:$0xff]
        %v285 = vld [vmem:[%s252 + $0x58] sm:$0xff]
        %v286 = vld [vmem:[%s252 + $0x60] sm:$0xff]
        %v287 = vld [vmem:[%s252 + $0x68] sm:$0xf]
        %v288 = vld [vmem:[%s2] sm:$0xf]
        %290 = vset.pattern.permute.xlu0 0
        %291 = vperm.xlu0 %290, %v288
        %v292 = vpop.permute.xlu0 %291
        %vm294 = vcmask 883712
        %v296 = vsel %vm294, %v273, 0
        %vm298 = vcmask 1043456
        %v300 = vsel %vm298, %v287, 0
        %302 = vmatprep.subr.mxu0 0.0
        %303 = vmatpush1.msra.mxu0 %v274
        %304 = vmatprep.subr.mxu0 0.0
        %305 = vmatpush1.msra.mxu0 %v275
        %306 = vmatprep.subr.mxu0 0.0
        %307 = vmatpush1.msra.mxu0 %v276
        %308 = vmatprep.subr.mxu0 0.0
        %309 = vmatpush1.msra.mxu0 %v277
        %310 = vmatprep.subr.mxu0 0.0
        %311 = vmatpush1.msra.mxu0 %v278
        %312 = vmatprep.subr.mxu0 0.0
        %313 = vmatpush1.msra.mxu0 %v279
        %314 = vmatprep.subr.mxu0 0.0
        %315 = vmatpush1.msra.mxu0 %v280
        %316 = vmatprep.subr.mxu0 0.0
        %317 = vmatpush1.msra.mxu0 %v281
        %318 = vmatprep.subr.mxu0 0.0
        %319 = vmatpush1.msra.mxu0 %v282
        %320 = vmatprep.subr.mxu0 0.0
        %321 = vmatpush1.msra.mxu0 %v283
        %322 = vmatprep.subr.mxu0 0.0
        %323 = vmatpush1.msra.mxu0 %v284
        %324 = vmatprep.subr.mxu0 0.0
        %325 = vmatpush1.msra.mxu0 %v285
        %326 = vmatprep.subr.mxu0 0.0
        %327 = vmatpush1.msra.mxu0 %v286
        %328 = vmatprep.subr.mxu0 0.0
        %329 = vmatpush1.msra.mxu0 %v300
        %330 = vmatprep.subr.mxu0 0.0
        %331 = vmatpush1.msra.mxu0 0.0
        %332 = vmatprep.subr.mxu0 0.0
        %333 = vmatpush1.msra.mxu0 0.0
        %334 = vmatprep.subr.mxu0 0.0
        %335 = vmatpush1.msra.mxu0 0.0
        %336 = vmatprep.subr.mxu0 0.0
        %337 = vmatpush1.msra.mxu0 0.0
        %338 = vmatprep.subr.mxu0 0.0
        %339 = vmatpush1.msra.mxu0 0.0
        %340 = vmatprep.subr.mxu0 0.0
        %341 = vmatpush1.msra.mxu0 0.0
        %342 = vmatprep.subr.mxu0 0.0
        %343 = vmatpush1.msra.mxu0 0.0
        %344 = vmatprep.subr.mxu0 0.0
        %345 = vmatpush1.msra.mxu0 0.0
        %346 = vmatprep.subr.mxu0 0.0
        %347 = vmatpush1.msra.mxu0 0.0
        %348 = vmatprep.subr.mxu0 0.0
        %349 = vmatpush1.msra.mxu0 0.0
        %350 = vmatprep.subr.mxu0 0.0
        %351 = vmatpush1.msra.mxu0 0.0
        %352 = vmatprep.subr.mxu0 0.0
        %353 = vmatpush1.msra.mxu0 0.0
        %354 = vmatprep.subr.mxu0 0.0
        %355 = vmatpush1.msra.mxu0 0.0
        %356 = vmatprep.subr.mxu0 0.0
        %357 = vmatpush1.msra.mxu0 0.0
        %358 = vmatprep.subr.mxu0 0.0
        %359 = vmatpush1.msra.mxu0 0.0
        %360 = vmatprep.subr.mxu0 0.0
        %361 = vmatpush1.msra.mxu0 0.0
        %362 = vmatprep.subr.mxu0 0.0
        %363 = vmatpush1.msra.mxu0 0.0
        %364 = vmatprep.subr.mxu0 0.0
        %365 = vmatpush1.msra.mxu0 0.0
        %366 = vmatprep.mubr.f32.mxu0 0.0
        %367 = vmatmul.mubr.f32.gmra.mrb[0].mxu0 %v296
        %v368 = vpop.f32.mrb[0].mxu0
        %v369 = vadd.f32 %v292, %v368
        %v370 = vpop.f32.mrb[0].mxu0
        %371 = vdwg.mxu0
        %372 = vst [vmem:[%s272] sm:$0xf] %v369
        %s373 = sand.u32 %s109, 1
        %s374 = scalar_lea.sflag [#allocation4], %s373
        %s375 = sand.u32 %s109, 1
        %s376 = smul.addr %s375, 4
        %s377 = scalar_lea.vmem [#allocation3], %s376
        // Predicated region
        $region71: #{tpu_custom_call.1} parent=65 // pred_check
          %p378 = pneg %p119
        $region72: #{tpu_custom_call.1} parent=65 // pred_check_branch
          %380 = sbr.rel (%p378) target = $region74
        $region73: #{tpu_custom_call.1} parent=65 // pred_region
          %s382 = ssub.s32 64, 64
          %383 = vsyncadd %s374, %s382
          %s384 = smul.addr %s21, 2
          %s385 = sadd.s32 %s22, %s384
          %s386 = smul.addr %s385, 64
          %s387 = scalar_lea.hbm %s3, %s386
          %s389 = sshll.u32 %s377, 4
          %s390 = int_to_ptr.vmem [resolvable:$true] %s389
          %392 = dma.vmem_to_hbm [thread:$0]  %s390, 64, %s387, %s374
        $region74: #{tpu_custom_call.1} parent=65 // pred_fallthru
          _
      $region66: #{tpu_custom_call.1} parent=5 // pred_fallthru
        _
      %p393 = scmp.le.s32.totalorder 2, %s12
      // Predicated region
      $region75: #{tpu_custom_call.1} parent=5 // pred_check
        %p394 = pneg %p393
      $region76: #{tpu_custom_call.1} parent=5 // pred_check_branch
        %396 = sbr.rel (%p394) target = $region78
      $region77: #{tpu_custom_call.1} parent=5 // pred_region
        %s397 = ssub.s32 %s12, 2
        // Predicated region
        $region79: #{tpu_custom_call.1} parent=77 // pred_check
          %p398 = pneg %p125
        $region80: #{tpu_custom_call.1} parent=77 // pred_check_branch
          %400 = sbr.rel (%p398) target = $region82
        $region81: #{tpu_custom_call.1} parent=77 // pred_region
          %s401 = sand.u32 %s110, 1
          %s402 = scalar_lea.sflag [#allocation4], %s401
          %s403 = sand.u32 %s110, 1
          %s404 = smul.addr %s403, 4
          %s405 = scalar_lea.vmem [#allocation3], %s404
          %406 = dma.done %s402, 64
        $region82: #{tpu_custom_call.1} parent=77 // pred_fallthru
          _
      $region78: #{tpu_custom_call.1} parent=5 // pred_fallthru
        _
    $region6: #{tpu_custom_call.1} parent=1 // loop_footer
      %s16 = sadd.s32 1, %s12
    $region7: #{tpu_custom_call.1} parent=1 // loop_footer_branch
      %11 = sbr.rel target = $region3
    $region8: #{tpu_custom_call.1} parent=1 // loop_exit
      _
    %407 = vsyncpa [#allocation4], 1
    %s408 = scalar_lea.sflag [#allocation4], 1
    %409 = vsyncpa %s408, 1

</llo_original>
